<compile_context>
chip_gen: v6e
topology: v6e:2x2x1
jax: 0.10.0
libtpu: 0.0.40
codegen_flags: <defaults>
</compile_context>

<pallas_src>
import functools
import math

import jax
import jax.numpy as jnp
from jax.experimental import pallas as pl
from jax.experimental.pallas import tpu as pltpu


def _round_up(x, m):
    return ((x + m - 1) // m) * m


def _cdiv(a, b):
    return (a + b - 1) // b


def _vmem_capacity_bytes():
    """Physical VMEM per TensorCore; conservative fallback if the query fails."""
    try:
        info = pltpu.get_tpu_info()
        cap = getattr(info, "vmem_capacity_bytes", None)
        if cap:
            return int(cap)
    except Exception:
        pass
    return 64 * 1024 * 1024  # v7x-sized fallback is safe on every generation


def _pick_tile_h(h_padded, max_tile_h):
    """Largest multiple of 128 <= max_tile_h that divides h_padded (h_padded % 128 == 0)."""
    best = 128
    t = 128
    while t <= min(h_padded, max_tile_h):
        if h_padded % t == 0:
            best = t
        t += 128
    return best


def _estimate_vmem_bytes(tile_n, d_in, tile_h, d_out_p, out_bytes):
    total = 0
    total += 2 * tile_n * d_in * 4             # x tile (f32), double-buffered
    total += 2 * d_in * tile_h * 2             # W1 hidden slab (bf16), double-buffered
    total += 2 * tile_h * 4                    # b1 slab
    total += 2 * tile_h * d_out_p * 2          # W2 hidden slab (bf16), double-buffered
    total += 2 * d_out_p * 4                   # b2
    total += 2 * tile_n * d_out_p * out_bytes  # output tile, double-buffered
    total += tile_n * d_out_p * 4              # f32 accumulator scratch
    total += tile_n * tile_h * (4 + 2)         # h slab (f32) + bf16 copy for 2nd dot
    return total


def prepare_params(w1, b1, w2, b2):
    """One-time weight preprocessing: pad feature dims to 128 lanes, cast to bf16.

    Weights are stored (in_features, out_features) so the kernel computes
    x @ W + b (equivalent to PyTorch's x @ linear.weight.T + linear.bias).
    Zero padding is semantics-preserving: padded hidden units have zero weights
    and zero bias -> relu(0)=0 and hit zero W2 rows; padded output columns are
    sliced off by the wrapper.
    """
    D_in, H = w1.shape
    D_out = w2.shape[1]
    H_p = _round_up(H, 128)
    D_out_p = _round_up(D_out, 128)

    w1_p = jnp.pad(w1, ((0, 0), (0, H_p - H))).astype(jnp.bfloat16)
    b1_p = jnp.pad(b1, (0, H_p - H)).reshape(1, H_p).astype(jnp.float32)
    w2_p = jnp.pad(w2, ((0, H_p - H), (0, D_out_p - D_out))).astype(jnp.bfloat16)
    b2_p = jnp.pad(b2, (0, D_out_p - D_out)).reshape(1, D_out_p).astype(jnp.float32)

    meta = dict(D_in=D_in, H=H, D_out=D_out, H_p=H_p, D_out_p=D_out_p)
    return (w1_p, b1_p, w2_p, b2_p), meta


def _two_layer_kernel(x_ref, w1_ref, b1_ref, w2_ref, b2_ref, o_ref, acc_ref):
    hj = pl.program_id(1)

    @pl.when(hj == 0)
    def _init():
        acc_ref[...] = jnp.zeros_like(acc_ref)

    # Layer 1 hidden slab: bf16 operands on the MXU (x cast happens in-kernel so
    # the wrapper never does a separate HBM cast pass), f32 accumulate + epilogue.
    x_bf = x_ref[...].astype(jnp.bfloat16)
    h = jnp.dot(x_bf, w1_ref[...], preferred_element_type=jnp.float32)
    h = jnp.maximum(h + b1_ref[...], 0.0)                       # (tile_n, tile_h)

    # Layer 2 partial: accumulate this hidden slab's contribution in f32.
    acc_ref[...] += jnp.dot(h.astype(jnp.bfloat16), w2_ref[...],
                            preferred_element_type=jnp.float32)

    @pl.when(hj == pl.num_programs(1) - 1)
    def _finalize():
        y = jnp.maximum(acc_ref[...] + b2_ref[...], 0.0)        # bias2 + ReLU
        o_ref[...] = y.astype(o_ref.dtype)


@functools.partial(
    jax.jit,
    static_argnames=("tile_n", "tile_h", "n_pad", "d_out", "vmem_limit_bytes"))
def _forward(x, w1_p, b1_p, w2_p, b2_p, *, tile_n, tile_h, n_pad, d_out,
             vmem_limit_bytes):
    N, D_in = x.shape
    H_p = w1_p.shape[1]
    D_out_p = w2_p.shape[1]

    x_p = jnp.pad(x, ((0, n_pad - N), (0, 0))) if n_pad != N else x

    n_tiles = n_pad // tile_n
    h_tiles = H_p // tile_h
    grid = (n_tiles, h_tiles)

    out_bytes = jnp.dtype(x.dtype).itemsize
    flops = 2 * n_pad * (D_in * H_p + H_p * D_out_p)
    bytes_accessed = (n_pad * D_in * out_bytes            # x
                      + D_in * H_p * 2 + H_p * D_out_p * 2  # bf16 weights
                      + H_p * 4 + D_out_p * 4               # biases
                      + n_pad * D_out_p * out_bytes)        # output

    out = pl.pallas_call(
        _two_layer_kernel,
        out_shape=jax.ShapeDtypeStruct((n_pad, D_out_p), x.dtype),
        grid=grid,
        in_specs=[
            # x: same block for every hidden step -> fetched once per batch tile.
            pl.BlockSpec((tile_n, D_in), lambda i, j: (i, 0)),
            # W1 / b1 / W2: streamed hidden-dim slabs (double-buffered DMA).
            pl.BlockSpec((D_in, tile_h), lambda i, j: (0, j)),
            pl.BlockSpec((1, tile_h), lambda i, j: (0, j)),
            pl.BlockSpec((tile_h, D_out_p), lambda i, j: (j, 0)),
            pl.BlockSpec((1, D_out_p), lambda i, j: (0, 0)),
        ],
        # Output block revisited across the hidden axis -> written back once per i.
        out_specs=pl.BlockSpec((tile_n, D_out_p), lambda i, j: (i, 0)),
        scratch_shapes=[pltpu.VMEM((tile_n, D_out_p), jnp.float32)],
        compiler_params=pltpu.CompilerParams(
            dimension_semantics=("parallel", "arbitrary"),
            vmem_limit_bytes=vmem_limit_bytes,
        ),
        cost_estimate=pl.CostEstimate(
            flops=flops, transcendentals=0, bytes_accessed=bytes_accessed),
    )(x_p, w1_p, b1_p, w2_p, b2_p)

    return out[:N, :d_out]


def two_layer_net(x, params, meta):
    """x: (N, D_in) -> (N, D_out).  params/meta come from prepare_params()."""
    w1_p, b1_p, w2_p, b2_p = params
    N, D_in = x.shape
    assert D_in == meta["D_in"], "input feature dim mismatch"
    H_p, D_out_p = meta["H_p"], meta["D_out_p"]
    out_bytes = jnp.dtype(x.dtype).itemsize

    vmem_cap = _vmem_capacity_bytes()
    budget = int(0.70 * vmem_cap)                           # headroom for compiler
    vmem_limit = min(int(0.85 * vmem_cap), 100 * 1024 * 1024)

    # Generation-aware batch-tile cap: 1024 rows on 128-MiB parts, 512 on v7x.
    tile_n_cap = 1024 if vmem_cap >= 96 * 1024 * 1024 else 512
    tile_h = _pick_tile_h(H_p, max_tile_h=512)

    # Shrink tiles until the double-buffered working set fits the budget.
    tile_n = min(tile_n_cap, _round_up(N, 8))
    while _estimate_vmem_bytes(tile_n, D_in, tile_h, D_out_p, out_bytes) > budget:
        if tile_n > 128:
            tile_n = max(128, _round_up(tile_n // 2, 8))
        elif tile_h > 128:
            tile_h = _pick_tile_h(H_p, max_tile_h=tile_h // 2)
        else:
            break

    # Balance batch tiles against N so padding waste stays < 8 rows per tile.
    n_tiles = _cdiv(N, tile_n)
    tile_n = _round_up(_cdiv(N, n_tiles), 8)
    n_pad = n_tiles * tile_n

    return _forward(x, w1_p, b1_p, w2_p, b2_p,
                    tile_n=tile_n, tile_h=tile_h, n_pad=n_pad,
                    d_out=meta["D_out"], vmem_limit_bytes=vmem_limit)


def _reference_f32(x, w1, b1, w2, b2):
    h = jnp.maximum(x @ w1 + b1, 0.0)
    return jnp.maximum(h @ w2 + b2, 0.0)


def _reference_bf16(x, w1, b1, w2, b2):
    # Mirrors the kernel's compute path: bf16 MXU operands, f32 accumulation,
    # f32 bias + ReLU epilogue.
    bf = jnp.bfloat16
    h = jnp.dot(x.astype(bf), w1.astype(bf), preferred_element_type=jnp.float32)
    h = jnp.maximum(h + b1, 0.0)
    y = jnp.dot(h.astype(bf), w2.astype(bf), preferred_element_type=jnp.float32)
    return jnp.maximum(y + b2, 0.0)


if __name__ == "__main__":
    # Small shapes consistent with the module: D_in=32, H=16, D_out=8, batch N=8.
    N, D_in, H, D_out = 8, 32, 16, 8

    key = jax.random.PRNGKey(0)
    kx, kw1, kb1, kw2, kb2 = jax.random.split(key, 5)

    x = jax.random.normal(kx, (N, D_in), dtype=jnp.float32)
    # Deterministic parameter init (PyTorch-style uniform bounds).
    bound1 = 1.0 / math.sqrt(D_in)
    w1 = jax.random.uniform(kw1, (D_in, H), minval=-bound1, maxval=bound1,
                            dtype=jnp.float32)
    b1 = jax.random.uniform(kb1, (H,), minval=-bound1, maxval=bound1,
                            dtype=jnp.float32)
    bound2 = 1.0 / math.sqrt(H)
    w2 = jax.random.uniform(kw2, (H, D_out), minval=-bound2, maxval=bound2,
                            dtype=jnp.float32)
    b2 = jax.random.uniform(kb2, (D_out,), minval=-bound2, maxval=bound2,
                            dtype=jnp.float32)

    params, meta = prepare_params(w1, b1, w2, b2)   # one-time pad + bf16 cast
    y = two_layer_net(x, params, meta)
    jax.block_until_ready(y)
    assert y.shape == (N, D_out)

    # Tight check against a reference mirroring the kernel's bf16/f32 path.
    y_bf = _reference_bf16(x, w1, b1, w2, b2)
    assert jnp.allclose(y, y_bf, atol=1e-4, rtol=1e-4), "mismatch vs bf16 ref"

    # Loose check against the pure-f32 PyTorch-equivalent forward (bf16 operand
    # rounding makes 1e-5 tolerances inappropriate here).
    y_f32 = _reference_f32(x, w1, b1, w2, b2)
    assert jnp.allclose(y, y_f32, atol=5e-2, rtol=5e-2), "mismatch vs f32 ref"

    print("KERNEL_OK")
</pallas_src>

<mosaic_0001>
module attributes {stable_mosaic.version = 11 : i64} {
  func.func @_two_layer_kernel(%arg0: i32, %arg1: i32, %arg2: memref<8x32xf32, #tpu.memory_space<vmem>>, %arg3: memref<32x128xbf16, #tpu.memory_space<vmem>>, %arg4: memref<1x128xf32, #tpu.memory_space<vmem>>, %arg5: memref<128x128xbf16, #tpu.memory_space<vmem>>, %arg6: memref<1x128xf32, #tpu.memory_space<vmem>>, %arg7: memref<8x128xf32, #tpu.memory_space<vmem>>, %arg8: memref<8x128xf32, #tpu.memory_space<vmem>>) attributes {dimension_semantics = [#tpu.dimension_semantics<parallel>, #tpu.dimension_semantics<arbitrary>], iteration_bounds = array<i64: 1, 1>, scalar_prefetch = 0 : i64, scratch_operands = 1 : i64, tpu.core_type = #tpu.core_type<tc>, window_params = [{transform_indices = @transform_0, window_bounds = array<i64: 8, 32>}, {transform_indices = @transform_1, window_bounds = array<i64: 32, 128>}, {transform_indices = @transform_2, window_bounds = array<i64: 1, 128>}, {transform_indices = @transform_3, window_bounds = array<i64: 128, 128>}, {pipeline_mode = #tpu.pipeline_mode<synchronous>, transform_indices = @transform_4, window_bounds = array<i64: 1, 128>}, {transform_indices = @transform_5, window_bounds = array<i64: 8, 128>}]} {
    %c0_i32 = arith.constant 0 : i32
    %0 = arith.cmpi eq, %arg1, %c0_i32 : i32
    %1 = arith.extui %0 : i1 to i32
    %c0_i32_0 = arith.constant 0 : i32
    %2 = arith.cmpi ne, %1, %c0_i32_0 : i32
    scf.if %2 {
      %cst_16 = arith.constant 0.000000e+00 : f32
      %21 = vector.broadcast %cst_16 : f32 to vector<8x128xf32>
      %c0_17 = arith.constant 0 : index
      %c0_18 = arith.constant 0 : index
      %22 = vector.load %arg8[%c0_17, %c0_18] : memref<8x128xf32, #tpu.memory_space<vmem>>, vector<8x128xf32>
      tpu.vector_store %arg8[%c0_17, %c0_18], %21 {strides = array<i32>} : memref<8x128xf32, #tpu.memory_space<vmem>>, vector<8x128xf32>,
    } else {
    }
    %c0 = arith.constant 0 : index
    %c0_1 = arith.constant 0 : index
    %3 = vector.load %arg2[%c0, %c0_1] : memref<8x32xf32, #tpu.memory_space<vmem>>, vector<8x32xf32>
    %4 = arith.truncf %3 : vector<8x32xf32> to vector<8x32xbf16>
    %c0_2 = arith.constant 0 : index
    %c0_3 = arith.constant 0 : index
    %5 = vector.load %arg3[%c0_2, %c0_3] : memref<32x128xbf16, #tpu.memory_space<vmem>>, vector<32x128xbf16>
    %cst = arith.constant dense<0.000000e+00> : vector<8x128xf32>
    %6 = tpu.matmul %4, %5, %cst {dimension_numbers = #tpu.dot_dimension_numbers<[1], [0], [0], [1], [0, 0, 1, 1], [], []>} : vector<8x32xbf16>, vector<32x128xbf16>, vector<8x128xf32> -> vector<8x128xf32>
    %c0_4 = arith.constant 0 : index
    %c0_5 = arith.constant 0 : index
    %7 = vector.load %arg4[%c0_4, %c0_5] : memref<1x128xf32, #tpu.memory_space<vmem>>, vector<1x128xf32>
    %8 = vector.broadcast %7 : vector<1x128xf32> to vector<8x128xf32>
    %9 = arith.addf %6, %8 : vector<8x128xf32>
    %cst_6 = arith.constant 0.000000e+00 : f32
    %10 = vector.broadcast %cst_6 : f32 to vector<8x128xf32>
    %11 = arith.maximumf %9, %10 : vector<8x128xf32>
    %c0_7 = arith.constant 0 : index
    %c0_8 = arith.constant 0 : index
    %12 = vector.load %arg8[%c0_7, %c0_8] : memref<8x128xf32, #tpu.memory_space<vmem>>, vector<8x128xf32>
    %13 = arith.truncf %11 : vector<8x128xf32> to vector<8x128xbf16>
    %c0_9 = arith.constant 0 : index
    %c0_10 = arith.constant 0 : index
    %14 = vector.load %arg5[%c0_9, %c0_10] : memref<128x128xbf16, #tpu.memory_space<vmem>>, vector<128x128xbf16>
    %cst_11 = arith.constant dense<0.000000e+00> : vector<8x128xf32>
    %15 = tpu.matmul %13, %14, %cst_11 {dimension_numbers = #tpu.dot_dimension_numbers<[1], [0], [0], [1], [0, 0, 1, 1], [], []>} : vector<8x128xbf16>, vector<128x128xbf16>, vector<8x128xf32> -> vector<8x128xf32>
    %16 = arith.addf %12, %15 : vector<8x128xf32>
    %c0_12 = arith.constant 0 : index
    %c0_13 = arith.constant 0 : index
    %17 = vector.load %arg8[%c0_12, %c0_13] : memref<8x128xf32, #tpu.memory_space<vmem>>, vector<8x128xf32>
    tpu.vector_store %arg8[%c0_12, %c0_13], %16 {strides = array<i32>} : memref<8x128xf32, #tpu.memory_space<vmem>>, vector<8x128xf32>,
    %c0_i32_14 = arith.constant 0 : i32
    %18 = arith.cmpi eq, %arg1, %c0_i32_14 : i32
    %19 = arith.extui %18 : i1 to i32
    %c0_i32_15 = arith.constant 0 : i32
    %20 = arith.cmpi ne, %19, %c0_i32_15 : i32
    scf.if %20 {
      %c0_16 = arith.constant 0 : index
      %c0_17 = arith.constant 0 : index
      %21 = vector.load %arg8[%c0_16, %c0_17] : memref<8x128xf32, #tpu.memory_space<vmem>>, vector<8x128xf32>
      %c0_18 = arith.constant 0 : index
      %c0_19 = arith.constant 0 : index
      %22 = vector.load %arg6[%c0_18, %c0_19] : memref<1x128xf32, #tpu.memory_space<vmem>>, vector<1x128xf32>
      %23 = vector.broadcast %22 : vector<1x128xf32> to vector<8x128xf32>
      %24 = arith.addf %21, %23 : vector<8x128xf32>
      %cst_20 = arith.constant 0.000000e+00 : f32
      %25 = vector.broadcast %cst_20 : f32 to vector<8x128xf32>
      %26 = arith.maximumf %24, %25 : vector<8x128xf32>
      %c0_21 = arith.constant 0 : index
      %c0_22 = arith.constant 0 : index
      %27 = vector.load %arg7[%c0_21, %c0_22] : memref<8x128xf32, #tpu.memory_space<vmem>>, vector<8x128xf32>
      tpu.vector_store %arg7[%c0_21, %c0_22], %26 {strides = array<i32>} : memref<8x128xf32, #tpu.memory_space<vmem>>, vector<8x128xf32>,
    } else {
    }
    return
  }
  func.func @transform_0(%arg0: i32, %arg1: i32) -> (i32, i32) {
    %c0_i32 = arith.constant 0 : i32
    %c0_i32_0 = arith.constant 0 : i32
    return %arg0, %c0_i32 : i32, i32
  }
  func.func @transform_1(%arg0: i32, %arg1: i32) -> (i32, i32) {
    %c0_i32 = arith.constant 0 : i32
    %c0_i32_0 = arith.constant 0 : i32
    return %c0_i32, %arg1 : i32, i32
  }
  func.func @transform_2(%arg0: i32, %arg1: i32) -> (i32, i32) {
    %c0_i32 = arith.constant 0 : i32
    %c0_i32_0 = arith.constant 0 : i32
    return %c0_i32, %arg1 : i32, i32
  }
  func.func @transform_3(%arg0: i32, %arg1: i32) -> (i32, i32) {
    %c0_i32 = arith.constant 0 : i32
    %c0_i32_0 = arith.constant 0 : i32
    return %arg1, %c0_i32 : i32, i32
  }
  func.func @transform_4(%arg0: i32, %arg1: i32) -> (i32, i32) {
    %c0_i32 = arith.constant 0 : i32
    %c0_i32_0 = arith.constant 0 : i32
    %c0_i32_1 = arith.constant 0 : i32
    return %c0_i32, %c0_i32_0 : i32, i32
  }
  func.func @transform_5(%arg0: i32, %arg1: i32) -> (i32, i32) {
    %c0_i32 = arith.constant 0 : i32
    %c0_i32_0 = arith.constant 0 : i32
    return %arg0, %c0_i32 : i32, i32
  }
}

</mosaic_0001>

<llo_original>
// kernel: _forward.1
$region0: #{_forward.1}
  #allocation0 [shape = 'u32[]', space=smem, size = 0x4, offset = 0x4, fixed_abs, tag = 'smem constant byte address 0x4 - core index']
  #allocation1 [shape = 'u32[144,128]{1,0:T(1,128)}', space=vmem, size = 0x12000, scoped, tag = 'internal scratch']
  #allocation2 [shape = 'f32[8,128]{1,0:T(8,128)}', space=vmem, size = 0x1000, scoped, tag = 'scratch operand']
  %s0 = inlined_call_operand.hbm [shape: f32[8,32], index: 0, kind: input, shape index: {}]
  %s1 = inlined_call_operand.hbm [shape: bf16[32,128], index: 1, kind: input, shape index: {}]
  %s2 = inlined_call_operand.vmem [shape: f32[1,128], index: 2, kind: input, shape index: {}]
  %s3 = inlined_call_operand.hbm [shape: bf16[128,128], index: 3, kind: input, shape index: {}]
  %s4 = inlined_call_operand.vmem [shape: f32[1,128], index: 4, kind: input, shape index: {}]
  %s5 = inlined_call_operand.hbm [shape: f32[8,128], index: 5, kind: output, shape index: {}]
  %s6 = sld [smem:[#allocation0]]
  $region50: #{_forward.1} parent=0
    _
  %s8 = ssub.s32 1, %s6
  %s9 = scalar_select 0, %s8, %s6
  $region1: #{_forward.1} parent=0
    #allocation3 [shape = 'u8[4096]{0}', space=vmem, size = 0x1000, scoped, tag = 'input window, operand 0, single buffered']
    #allocation4 [shape = 's32[1]{0}', space=sflag, size = 0x4, scoped, tag = 'scoped memory for _forward.1']
    #allocation5 [shape = 's32[1]{0}', space=sflag, size = 0x4, scoped, tag = 'scoped memory for _forward.1']
    #allocation6 [shape = 'u8[8192]{0}', space=vmem, size = 0x2000, scoped, tag = 'input window, operand 1, single buffered']
    #allocation7 [shape = 's32[1]{0}', space=sflag, size = 0x4, scoped, tag = 'scoped memory for _forward.1']
    #allocation8 [shape = 'u8[32768]{0}', space=vmem, size = 0x8000, scoped, tag = 'input window, operand 3, single buffered']
    #allocation9 [shape = 'u8[4096]{0}', space=vmem, size = 0x1000, scoped, tag = 'output window, operand 0, single buffered']
    %10 = vsyncpa [#allocation4], 0
    %11 = vsyncpa [#allocation7], 0
    %12 = vsyncpa [#allocation5], 0
    // Predicated region
    $region2: #{_forward.1} parent=1 // pred_check
      _
    $region3: #{_forward.1} parent=1 // pred_check_branch
      %14 = sbr.rel (0) target = $region5
    $region4: #{_forward.1} parent=1 // pred_region
      %s16 = ssub.s32 128, 128
      %17 = vsyncadd [#allocation4], %s16
      %s19 = sshll.u32 [#allocation3], 4
      %s20 = int_to_ptr.vmem [resolvable:$true] %s19
      %22 = dma.hbm_to_vmem [thread:$0]  %s0, 128, %s20, [#allocation4]
    $region5: #{_forward.1} parent=1 // pred_fallthru
      _
    // Predicated region
    $region6: #{_forward.1} parent=1 // pred_check
      _
    $region7: #{_forward.1} parent=1 // pred_check_branch
      %24 = sbr.rel (0) target = $region9
    $region8: #{_forward.1} parent=1 // pred_region
      %s26 = ssub.s32 256, 256
      %27 = vsyncadd [#allocation7], %s26
      %s28 = sshll.u32 [#allocation6], 4
      %s29 = int_to_ptr.vmem [resolvable:$true] %s28
      %34 = dma.hbm_to_vmem [thread:$0]  %s1, 256, %s29, [#allocation7], 64, 64, 4
    $region9: #{_forward.1} parent=1 // pred_fallthru
      _
    // Predicated region
    $region10: #{_forward.1} parent=1 // pred_check
      _
    $region11: #{_forward.1} parent=1 // pred_check_branch
      %36 = sbr.rel (0) target = $region13
    $region12: #{_forward.1} parent=1 // pred_region
      _
    $region13: #{_forward.1} parent=1 // pred_fallthru
      _
    // Predicated region
    $region14: #{_forward.1} parent=1 // pred_check
      _
    $region15: #{_forward.1} parent=1 // pred_check_branch
      %38 = sbr.rel (0) target = $region17
    $region16: #{_forward.1} parent=1 // pred_region
      %s40 = ssub.s32 1024, 1024
      %41 = vsyncadd [#allocation7], %s40
      %s42 = sshll.u32 [#allocation8], 4
      %s43 = int_to_ptr.vmem [resolvable:$true] %s42
      %48 = dma.hbm_to_vmem [thread:$0]  %s3, 1024, %s43, [#allocation7], 64, 64, 4
    $region17: #{_forward.1} parent=1 // pred_fallthru
      _
    // Predicated region
    $region18: #{_forward.1} parent=1 // pred_check
      _
    $region19: #{_forward.1} parent=1 // pred_check_branch
      %50 = sbr.rel (0) target = $region21
    $region20: #{_forward.1} parent=1 // pred_region
      _
    $region21: #{_forward.1} parent=1 // pred_fallthru
      _
    // Predicated region
    $region22: #{_forward.1} parent=1 // pred_check
      _
    $region23: #{_forward.1} parent=1 // pred_check_branch
      %52 = sbr.rel (0) target = $region25
    $region24: #{_forward.1} parent=1 // pred_region
      %53 = dma.done [#allocation4], 128
    $region25: #{_forward.1} parent=1 // pred_fallthru
      _
    // Predicated region
    $region26: #{_forward.1} parent=1 // pred_check
      _
    $region27: #{_forward.1} parent=1 // pred_check_branch
      %55 = sbr.rel (0) target = $region29
    $region28: #{_forward.1} parent=1 // pred_region
      %56 = dma.done [#allocation7], 256
    $region29: #{_forward.1} parent=1 // pred_fallthru
      _
    // Predicated region
    $region30: #{_forward.1} parent=1 // pred_check
      _
    $region31: #{_forward.1} parent=1 // pred_check_branch
      %58 = sbr.rel (0) target = $region33
    $region32: #{_forward.1} parent=1 // pred_region
      %59 = dma.done [#allocation7], 1024
    $region33: #{_forward.1} parent=1 // pred_fallthru
      _
    %p61 = scmp.eq.s32.totalorder 0, 0
    // Predicated region
    $region34: #{_forward.1} parent=1 // pred_check
      %p62 = pneg %p61
    $region35: #{_forward.1} parent=1 // pred_check_branch
      %64 = sbr.rel (%p62) target = $region37
    $region36: #{_forward.1} parent=1 // pred_region
      %65 = vst [vmem:[#allocation2] sm:$0xff] 0.0
    $region37: #{_forward.1} parent=1 // pred_fallthru
      _
    %v66 = vld [vmem:[#allocation3] sm:$0xff]
    %v67 = vpack.c.bf16 %v66, %v66
    %v68 = vld [vmem:[#allocation6] sm:$0xf]
    %v69 = vld [vmem:[#allocation6 + $0x4] sm:$0xf]
    %v70 = vld [vmem:[#allocation6 + $0x8] sm:$0xf]
    %v71 = vld [vmem:[#allocation6 + $0xc] sm:$0xf]
    %v72 = vld [vmem:[%s2] sm:$0x1]
    %v74 = vlaneseq
    %v75 = vshrl.u32 %v74, 7
    %v76 = vsub.s32 0, %v75
    %v77 = vrot.slane %v72, %v76
    %v83 = vunpack.c.l.b16 %v68
    %v84 = vunpack.c.l.b16 %v69
    %v85 = vunpack.c.l.b16 %v70
    %v86 = vunpack.c.l.b16 %v71
    %v87 = vpack.c.b16 %v84, %v83
    %v88 = vpack.c.b16 %v86, %v85
    %vm91 = vcmask 261120
    %v93 = vsel %vm91, %v67, 0
    %95 = vmatprep.subr.bf16.mxu0 0
    %96 = vmatpush1.bf16.msra.mxu0 0
    %97 = vmatprep.subr.bf16.mxu0 0
    %98 = vmatpush1.bf16.msra.mxu0 0
    %99 = vmatprep.subr.bf16.mxu0 0
    %100 = vmatpush1.bf16.msra.mxu0 0
    %101 = vmatprep.subr.bf16.mxu0 0
    %102 = vmatpush1.bf16.msra.mxu0 0
    %103 = vmatprep.subr.bf16.mxu0 0
    %104 = vmatpush1.bf16.msra.mxu0 0
    %105 = vmatprep.subr.bf16.mxu0 0
    %106 = vmatpush1.bf16.msra.mxu0 0
    %107 = vmatprep.subr.bf16.mxu0 0
    %108 = vmatpush1.bf16.msra.mxu0 %v88
    %109 = vmatprep.subr.bf16.mxu0 0
    %110 = vmatpush1.bf16.msra.mxu0 %v87
    %111 = vmatprep.subr.bf16.mxu0 0
    %112 = vmatpush2.bf16.msra.mxu0 0
    %113 = vmatprep.subr.bf16.mxu0 0
    %114 = vmatpush2.bf16.msra.mxu0 0
    %115 = vmatprep.subr.bf16.mxu0 0
    %116 = vmatpush2.bf16.msra.mxu0 0
    %117 = vmatprep.subr.bf16.mxu0 0
    %118 = vmatpush2.bf16.msra.mxu0 0
    %119 = vmatprep.subr.bf16.mxu0 0
    %120 = vmatpush2.bf16.msra.mxu0 0
    %121 = vmatprep.subr.bf16.mxu0 0
    %122 = vmatpush2.bf16.msra.mxu0 0
    %123 = vmatprep.subr.bf16.mxu0 0
    %124 = vmatpush2.bf16.msra.mxu0 0
    %125 = vmatprep.subr.bf16.mxu0 0
    %126 = vmatpush2.bf16.msra.mxu0 0
    %127 = vmatprep.mubr.bf16.mxu0 0
    %128 = vmatmul.mubr.bf16.gmra.mxu0 %v93
    %v129 = vpop.f32.mrf.mxu0
    %v130 = vadd.f32 %v77, %v129
    %v131 = vpop.f32.mrf.mxu0
    %v132 = vpop.f32.mrf.mxu0
    %v133 = vpop.f32.mrf.mxu0
    %134 = vdwg.mxu0
    %v135 = vmax.f32 %v130, 0.0
    %v136 = vld [vmem:[#allocation2] sm:$0xff]
    %v137 = vpack.c.bf16 %v135, %v135
    %v138 = vld [vmem:[#allocation8] sm:$0xf]
    %v139 = vld [vmem:[#allocation8 + $0x4] sm:$0xf]
    %v140 = vld [vmem:[#allocation8 + $0x8] sm:$0xf]
    %v141 = vld [vmem:[#allocation8 + $0xc] sm:$0xf]
    %v142 = vld [vmem:[#allocation8 + $0x10] sm:$0xf]
    %v143 = vld [vmem:[#allocation8 + $0x14] sm:$0xf]
    %v144 = vld [vmem:[#allocation8 + $0x18] sm:$0xf]
    %v145 = vld [vmem:[#allocation8 + $0x1c] sm:$0xf]
    %v146 = vld [vmem:[#allocation8 + $0x20] sm:$0xf]
    %v147 = vld [vmem:[#allocation8 + $0x24] sm:$0xf]
    %v148 = vld [vmem:[#allocation8 + $0x28] sm:$0xf]
    %v149 = vld [vmem:[#allocation8 + $0x2c] sm:$0xf]
    %v150 = vld [vmem:[#allocation8 + $0x30] sm:$0xf]
    %v151 = vld [vmem:[#allocation8 + $0x34] sm:$0xf]
    %v152 = vld [vmem:[#allocation8 + $0x38] sm:$0xf]
    %v153 = vld [vmem:[#allocation8 + $0x3c] sm:$0xf]
    %v170 = vunpack.c.l.b16 %v138
    %v171 = vunpack.c.l.b16 %v139
    %v172 = vunpack.c.l.b16 %v140
    %v173 = vunpack.c.l.b16 %v141
    %v174 = vunpack.c.l.b16 %v142
    %v175 = vunpack.c.l.b16 %v143
    %v176 = vunpack.c.l.b16 %v144
    %v177 = vunpack.c.l.b16 %v145
    %v178 = vunpack.c.l.b16 %v146
    %v179 = vunpack.c.l.b16 %v147
    %v180 = vunpack.c.l.b16 %v148
    %v181 = vunpack.c.l.b16 %v149
    %v182 = vunpack.c.l.b16 %v150
    %v183 = vunpack.c.l.b16 %v151
    %v184 = vunpack.c.l.b16 %v152
    %v185 = vunpack.c.l.b16 %v153
    %v186 = vpack.c.b16 %v171, %v170
    %v187 = vpack.c.b16 %v173, %v172
    %v188 = vpack.c.b16 %v175, %v174
    %v189 = vpack.c.b16 %v177, %v176
    %v190 = vpack.c.b16 %v179, %v178
    %v191 = vpack.c.b16 %v181, %v180
    %v192 = vpack.c.b16 %v183, %v182
    %v193 = vpack.c.b16 %v185, %v184
    %202 = vmatprep.subr.bf16.mxu0 0
    %203 = vmatpush1.bf16.msra.mxu0 %v193
    %204 = vmatprep.subr.bf16.mxu0 0
    %205 = vmatpush1.bf16.msra.mxu0 %v192
    %206 = vmatprep.subr.bf16.mxu0 0
    %207 = vmatpush1.bf16.msra.mxu0 %v191
    %208 = vmatprep.subr.bf16.mxu0 0
    %209 = vmatpush1.bf16.msra.mxu0 %v190
    %210 = vmatprep.subr.bf16.mxu0 0
    %211 = vmatpush1.bf16.msra.mxu0 %v189
    %212 = vmatprep.subr.bf16.mxu0 0
    %213 = vmatpush1.bf16.msra.mxu0 %v188
    %214 = vmatprep.subr.bf16.mxu0 0
    %215 = vmatpush1.bf16.msra.mxu0 %v187
    %216 = vmatprep.subr.bf16.mxu0 0
    %217 = vmatpush1.bf16.msra.mxu0 %v186
    %218 = vmatprep.subr.bf16.mxu0 0
    %219 = vmatpush2.bf16.msra.mxu0 0
    %220 = vmatprep.subr.bf16.mxu0 0
    %221 = vmatpush2.bf16.msra.mxu0 0
    %222 = vmatprep.subr.bf16.mxu0 0
    %223 = vmatpush2.bf16.msra.mxu0 0
    %224 = vmatprep.subr.bf16.mxu0 0
    %225 = vmatpush2.bf16.msra.mxu0 0
    %226 = vmatprep.subr.bf16.mxu0 0
    %227 = vmatpush2.bf16.msra.mxu0 0
    %228 = vmatprep.subr.bf16.mxu0 0
    %229 = vmatpush2.bf16.msra.mxu0 0
    %230 = vmatprep.subr.bf16.mxu0 0
    %231 = vmatpush2.bf16.msra.mxu0 0
    %232 = vmatprep.subr.bf16.mxu0 0
    %233 = vmatpush2.bf16.msra.mxu0 0
    %234 = vmatprep.mubr.bf16.mxu0 0
    %235 = vmatmul.mubr.bf16.gmra.mxu0 %v137
    %v236 = vpop.f32.mrf.mxu0
    %v237 = vadd.f32 0.0, %v236
    %v238 = vpop.f32.mrf.mxu0
    %v239 = vpop.f32.mrf.mxu0
    %v240 = vpop.f32.mrf.mxu0
    %241 = vdwg.mxu0
    %v242 = vadd.f32 %v136, %v237
    %243 = vst [vmem:[#allocation2] sm:$0xff] %v242
    // Predicated region
    $region38: #{_forward.1} parent=1 // pred_check
      %p244 = pneg %p61
    $region39: #{_forward.1} parent=1 // pred_check_branch
      %246 = sbr.rel (%p244) target = $region41
    $region40: #{_forward.1} parent=1 // pred_region
      %v247 = vld [vmem:[#allocation2] sm:$0xff]
      %v248 = vld [vmem:[%s4] sm:$0x1]
      %v250 = vlaneseq
      %v251 = vshrl.u32 %v250, 7
      %v252 = vsub.s32 0, %v251
      %v253 = vrot.slane %v248, %v252
      %v255 = vadd.f32 %v247, %v253
      %v256 = vmax.f32 %v255, 0.0
      %257 = vst [vmem:[#allocation9] sm:$0xff] %v256
    $region41: #{_forward.1} parent=1 // pred_fallthru
      _
    // Predicated region
    $region42: #{_forward.1} parent=1 // pred_check
      _
    $region43: #{_forward.1} parent=1 // pred_check_branch
      %259 = sbr.rel (0) target = $region45
    $region44: #{_forward.1} parent=1 // pred_region
      %s261 = ssub.s32 128, 128
      %262 = vsyncadd [#allocation5], %s261
      %s264 = sshll.u32 [#allocation9], 4
      %s265 = int_to_ptr.vmem [resolvable:$true] %s264
      %267 = dma.vmem_to_hbm [thread:$0]  %s265, 128, %s5, [#allocation5]
    $region45: #{_forward.1} parent=1 // pred_fallthru
      _
    // Predicated region
    $region46: #{_forward.1} parent=1 // pred_check
      _
    $region47: #{_forward.1} parent=1 // pred_check_branch
      %269 = sbr.rel (0) target = $region49
    $region48: #{_forward.1} parent=1 // pred_region
      %270 = dma.done [#allocation5], 128
    $region49: #{_forward.1} parent=1 // pred_fallthru
      _
    %271 = vsyncpa [#allocation4], 1
    %272 = vsyncpa [#allocation7], 1
    %273 = vsyncpa [#allocation5], 1

</llo_original>
